<compile_context>
chip_gen: v7x
topology: tpu7x:2x2x1
jax: 0.10.0
libtpu: 0.0.40
codegen_flags: <defaults>
</compile_context>

<pallas_src>
import functools
import math

import jax
import jax.numpy as jnp
from jax.experimental import pallas as pl
from jax.experimental.pallas import tpu as pltpu

EPS = 1e-5


def _silu(x):
    return x * jax.nn.sigmoid(x)


def _softplus(x):
    # numerically stable softplus
    return jnp.where(x > 20.0, x, jnp.log1p(jnp.exp(jnp.minimum(x, 20.0))))


def _vmem_capacity_bytes():
    try:
        return int(pltpu.get_tpu_info().vmem_capacity_bytes)
    except Exception:  # capacity query only; fall back to the smallest (v7x) size
        return 64 * 2**20


# ---------------------------------------------------------------------------
# Embedding: scalar-prefetch row gather (one (1, D) DMA per token).
# ---------------------------------------------------------------------------
def _gather_row_kernel(ids_ref, row_ref, o_ref):
    del ids_ref
    o_ref[...] = row_ref[...].astype(o_ref.dtype)


def embed_lookup(ids_flat, emb_table):
    n = ids_flat.shape[0]
    V, D = emb_table.shape
    emb3 = emb_table.reshape(V, 1, D)
    out = pl.pallas_call(
        _gather_row_kernel,
        out_shape=jax.ShapeDtypeStruct((n, 1, D), jnp.float32),
        grid_spec=pltpu.PrefetchScalarGridSpec(
            num_scalar_prefetch=1,
            grid=(n,),
            in_specs=[pl.BlockSpec((1, 1, D), lambda i, ids: (ids[i], 0, 0))],
            out_specs=pl.BlockSpec((1, 1, D), lambda i, ids: (i, 0, 0)),
        ),
        compiler_params=pltpu.CompilerParams(
            dimension_semantics=("arbitrary",)),
    )(ids_flat.astype(jnp.int32), emb3)
    return out.reshape(n, D)


# ---------------------------------------------------------------------------
# Fused backbone: all residual Mamba blocks in one pallas_call.
# grid = (layer, L-tile); layer outer ("arbitrary"), L-tile inner ("arbitrary").
# ---------------------------------------------------------------------------
def _backbone_kernel(x_ref, norm_w_ref, w_in_ref, conv_w_ref, conv_b_ref,
                     w_xproj_ref, w_dtp_ref, b_dtp_ref, A_neg_ref, skipD_ref,
                     w_out_ref, o_ref, h_s, tail_s,
                     *, d_inner, d_state, dt_rank, d_conv, tl, n_batch):
    l_idx = pl.program_id(0)                 # layer (outer)
    t_idx = pl.program_id(1)                 # sequence tile (inner, in order)
    ts = pl.multiple_of(t_idx * tl, tl)
    Bn = n_batch
    K = d_conv

    # SSM-state / conv-tail carries reset at every layer boundary (first L tile).
    @pl.when(t_idx == 0)
    def _():
        h_s[...] = jnp.zeros_like(h_s)
        tail_s[...] = jnp.zeros_like(tail_s)

    # Residual-stream input: layer 0 reads the embedded input; deeper layers read
    # the VMEM-resident output buffer holding the previous layer's output.
    x_in0 = x_ref[:, pl.ds(ts, tl), :]
    x_prev = o_ref[:, pl.ds(ts, tl), :]
    x3 = jnp.where(l_idx == 0, x_in0, x_prev).astype(jnp.float32)   # (B, tl, D)
    d_model = x3.shape[-1]
    x2 = x3.reshape(Bn * tl, d_model)                               # (BT, D)

    # --- pre-RMSNorm + fused in-projection [x | z] (bf16 MXU, f32 acc) -------
    var = jnp.mean(x2 * x2, axis=-1, keepdims=True)
    xn = (x2 * jax.lax.rsqrt(var + EPS) * norm_w_ref[0]).astype(jnp.bfloat16)
    xz = jnp.dot(xn, w_in_ref[0], preferred_element_type=jnp.float32)  # (BT, 2Di)
    xi = xz[:, :d_inner]
    z = xz[:, d_inner:]

    # --- causal depthwise conv (register-resident shifts + small tail carry) --
    conv_w = conv_w_ref[0]                                          # (K, Di)
    conv_b = conv_b_ref[0]                                          # (1, Di)
    xc_parts = []
    for b in range(Bn):
        xi_b = xi[b * tl:(b + 1) * tl, :]
        tail_b = tail_s[b, :K - 1, :]                               # prev tile tail
        xext = jnp.concatenate([tail_b, xi_b], axis=0)              # (tl+K-1, Di)
        acc = jnp.zeros((tl, d_inner), jnp.float32)
        for k in range(K):
            acc = acc + xext[k:k + tl, :] * conv_w[k:k + 1, :]
        xc_parts.append(_silu(acc + conv_b))
        tail_s[b, :K - 1, :] = xi_b[tl - (K - 1):, :]               # carry forward
    xc = jnp.concatenate(xc_parts, axis=0)                          # (BT, Di)

    # --- fused x-projection -> dt | B | C, low-rank dt projection -------------
    # TODO(synk): on v6e/v7x the K=dt_rank MXU pass is wasteful; pad dt_rank or
    #             compute delta with VPU broadcast-FMAs at production shapes.
    dbc = jnp.dot(xc.astype(jnp.bfloat16), w_xproj_ref[0],
                  preferred_element_type=jnp.float32)               # (BT, R+2N)
    dt = dbc[:, :dt_rank]
    delta = _softplus(jnp.dot(dt.astype(jnp.bfloat16), w_dtp_ref[0],
                              preferred_element_type=jnp.float32)
                      + b_dtp_ref[0])                               # (BT, Di)
    dx = delta * xc
    # transpose B/C once per tile so the scan reads (N, 1) columns directly
    bct = jnp.transpose(dbc[:, dt_rank:])                           # (2N, BT)
    BmT = bct[:d_state, :]                                          # (N, BT)
    CmT = bct[d_state:, :]                                          # (N, BT)
    A_neg = A_neg_ref[0]                                            # (N, Di) = -exp(A_log)

    # --- selective scan: per-step update, y fused into the step ---------------
    y_parts = []
    for b in range(Bn):
        h = h_s[b]                                                  # (N, Di) f32
        rows, packed = [], []
        for t in range(tl):
            col = b * tl + t
            dA_t = jnp.exp(A_neg * delta[col:col + 1, :])           # (N, Di)
            bx_t = BmT[:, col:col + 1] * dx[col:col + 1, :]         # (N, Di)
            h = dA_t * h + bx_t
            y_t = jnp.sum(CmT[:, col:col + 1] * h, axis=0, keepdims=True)
            rows.append(y_t)
            if len(rows) == 8:                                      # pack 8-row blocks
                packed.append(jnp.concatenate(rows, axis=0))
                rows = []
        if rows:
            packed.append(jnp.concatenate(rows, axis=0))
        h_s[b] = h
        y_parts.append(jnp.concatenate(packed, axis=0))             # (tl, Di)
    y = jnp.concatenate(y_parts, axis=0)                            # (BT, Di)

    # --- skip, gate, out-projection, residual ---------------------------------
    y = (y + xc * skipD_ref[0]) * _silu(z)
    out = jnp.dot(y.astype(jnp.bfloat16), w_out_ref[0],
                  preferred_element_type=jnp.float32)               # (BT, D)
    o_ref[:, pl.ds(ts, tl), :] = (x2 + out).reshape(Bn, tl, d_model).astype(o_ref.dtype)


PARAM_ORDER = ("norm_w", "w_in", "conv_w", "conv_b", "w_xproj", "w_dtp",
               "b_dtp", "A_neg", "D_p", "w_out")


def stack_layer_params(layers):
    stacked = {}
    for name in ("norm_w", "w_in", "conv_w", "conv_b", "w_xproj", "w_dtp",
                 "b_dtp", "D_p", "w_out"):
        stacked[name] = jnp.stack([p[name] for p in layers], axis=0)
    # A = -exp(A_log) precomputed outside the kernel.
    stacked["A_neg"] = jnp.stack([-jnp.exp(p["A_logT"]) for p in layers], axis=0)
    return stacked


def mamba_backbone(x, stacked, cfg):
    B, L, D = x.shape
    tl = cfg["tl"]
    d_inner, d_state = cfg["d_inner"], cfg["d_state"]
    dt_rank, d_conv = cfg["dt_rank"], cfg["d_conv"]
    n_layers = stacked["w_in"].shape[0]
    assert L % tl == 0 and tl % 8 == 0 and tl >= d_conv
    n_tiles = L // tl

    weights = [stacked[k] for k in PARAM_ORDER]
    kern = functools.partial(_backbone_kernel, d_inner=d_inner, d_state=d_state,
                             dt_rank=dt_rank, d_conv=d_conv, tl=tl, n_batch=B)

    w_specs = [pl.BlockSpec((1,) + tuple(w.shape[1:]), lambda l, t: (l, 0, 0))
               for w in weights]

    # VMEM budget clamped to the queried per-core capacity (64 MiB on v7x).
    w_bytes = sum(int(w.size) * w.dtype.itemsize for w in weights) // n_layers
    act_bytes = 2 * B * L * D * 4
    scr_bytes = 4 * (B * d_state * d_inner + B * 8 * d_inner)
    need = 2 * w_bytes + act_bytes + scr_bytes + (16 << 20)
    vmem_limit = int(min(0.8 * _vmem_capacity_bytes(), float(max(need, 32 << 20))))

    return pl.pallas_call(
        kern,
        out_shape=jax.ShapeDtypeStruct((B, L, D), jnp.float32),
        grid=(n_layers, n_tiles),
        in_specs=[pl.BlockSpec((B, L, D), lambda l, t: (0, 0, 0))] + w_specs,
        out_specs=pl.BlockSpec((B, L, D), lambda l, t: (0, 0, 0)),
        scratch_shapes=[pltpu.VMEM((B, d_state, d_inner), jnp.float32),  # SSM state
                        pltpu.VMEM((B, 8, d_inner), jnp.float32)],       # conv tail
        compiler_params=pltpu.CompilerParams(
            dimension_semantics=("arbitrary", "arbitrary"),
            vmem_limit_bytes=vmem_limit),
    )(x, *weights)


# ---------------------------------------------------------------------------
# Final RMSNorm fused with the classifier head (batch folded into the tile).
# ---------------------------------------------------------------------------
def _norm_head_kernel(x_ref, norm_w_ref, w_head_ref, b_head_ref, o_ref):
    xb = x_ref[...].astype(jnp.float32)                    # (B, tl, D)
    Bn, tl, D = xb.shape
    x2 = xb.reshape(Bn * tl, D)
    var = jnp.mean(x2 * x2, axis=-1, keepdims=True)
    xn = (x2 * jax.lax.rsqrt(var + EPS) * norm_w_ref[...]).astype(jnp.bfloat16)
    out = (jnp.dot(xn, w_head_ref[...], preferred_element_type=jnp.float32)
           + b_head_ref[...])
    o_ref[...] = out.reshape(Bn, tl, -1).astype(o_ref.dtype)


def norm_head(x, norm_w, w_head, b_head, *, tl):
    B, L, D = x.shape
    C = w_head.shape[1]
    assert L % tl == 0
    return pl.pallas_call(
        _norm_head_kernel,
        out_shape=jax.ShapeDtypeStruct((B, L, C), jnp.float32),
        grid=(L // tl,),
        in_specs=[pl.BlockSpec((B, tl, D), lambda t: (0, t, 0)),
                  pl.BlockSpec(norm_w.shape, lambda t: (0, 0)),
                  pl.BlockSpec(w_head.shape, lambda t: (0, 0)),
                  pl.BlockSpec(b_head.shape, lambda t: (0, 0))],
        out_specs=pl.BlockSpec((B, tl, C), lambda t: (0, t, 0)),
        compiler_params=pltpu.CompilerParams(
            dimension_semantics=("parallel",)),
    )(x, norm_w, w_head, b_head)


# ---------------------------------------------------------------------------
# Parameters, full forward, and a pure-JAX reference for validation.
# ---------------------------------------------------------------------------
def make_cfg(d_model, *, d_state=16, d_conv=4, expand=2, tl=32):
    return dict(d_model=d_model, d_state=d_state, d_conv=d_conv,
                d_inner=expand * d_model, dt_rank=math.ceil(d_model / 16), tl=tl)


def init_nar_mamba_params(key, *, vocab_size, d_model, n_layers, out_cls_dim,
                          d_state=16, d_conv=4, expand=2):
    d_inner = expand * d_model
    dt_rank = math.ceil(d_model / 16)
    keys = jax.random.split(key, n_layers + 2)
    emb = jax.random.normal(keys[0], (vocab_size, d_model), jnp.float32)
    layers = []
    for i in range(n_layers):
        ks = jax.random.split(keys[i + 1], 5)
        A_logT = (jnp.log(jnp.arange(1, d_state + 1, dtype=jnp.float32))[:, None]
                  * jnp.ones((1, d_inner), jnp.float32))       # S4D-real init
        layers.append(dict(
            norm_w=jnp.ones((1, d_model), jnp.float32),
            w_in=(0.05 * jax.random.normal(ks[0], (d_model, 2 * d_inner),
                                           jnp.float32)).astype(jnp.bfloat16),
            conv_w=0.3 * jax.random.normal(ks[1], (d_conv, d_inner), jnp.float32),
            conv_b=jnp.zeros((1, d_inner), jnp.float32),
            w_xproj=(0.05 * jax.random.normal(
                ks[2], (d_inner, dt_rank + 2 * d_state),
                jnp.float32)).astype(jnp.bfloat16),
            w_dtp=(0.2 * jax.random.normal(ks[3], (dt_rank, d_inner),
                                           jnp.float32)).astype(jnp.bfloat16),
            b_dtp=jnp.full((1, d_inner), -2.0, jnp.float32),
            A_logT=A_logT,
            D_p=jnp.ones((1, d_inner), jnp.float32),
            w_out=(0.05 * jax.random.normal(ks[4], (d_inner, d_model),
                                            jnp.float32)).astype(jnp.bfloat16),
        ))
    return dict(
        embedding=emb,
        layers=layers,
        norm_f=jnp.ones((1, d_model), jnp.float32),
        w_head=(0.05 * jax.random.normal(keys[-1], (d_model, out_cls_dim),
                                         jnp.float32)).astype(jnp.bfloat16),
        b_head=jnp.zeros((1, out_cls_dim), jnp.float32),
    )


def nar_mamba_forward(ids, params, cfg):
    B, L = ids.shape
    emb = params["embedding"]
    x = embed_lookup(ids.reshape(-1), emb).reshape(B, L, emb.shape[1])
    stacked = stack_layer_params(params["layers"])
    x = mamba_backbone(x, stacked, cfg)
    return norm_head(x, params["norm_f"], params["w_head"], params["b_head"],
                     tl=cfg["tl"])


def ref_forward(ids, params, cfg):
    d_inner, d_state, dt_rank = cfg["d_inner"], cfg["d_state"], cfg["dt_rank"]
    x = params["embedding"].astype(jnp.float32)[ids]          # (B, L, D)
    B, L, _ = x.shape
    for p in params["layers"]:
        var = jnp.mean(x * x, axis=-1, keepdims=True)
        xn = (x * jax.lax.rsqrt(var + EPS) * p["norm_w"][0]).astype(jnp.bfloat16)
        xz = jnp.dot(xn, p["w_in"], preferred_element_type=jnp.float32)
        xi, z = xz[..., :d_inner], xz[..., d_inner:]
        K = p["conv_w"].shape[0]
        xpad = jnp.pad(xi, ((0, 0), (K - 1, 0), (0, 0)))
        acc = jnp.zeros_like(xi)
        for k in range(K):
            acc = acc + xpad[:, k:k + L, :] * p["conv_w"][k][None, None, :]
        xc = _silu(acc + p["conv_b"][0])
        dbc = jnp.dot(xc.astype(jnp.bfloat16), p["w_xproj"],
                      preferred_element_type=jnp.float32)
        dt = dbc[..., :dt_rank]
        Bm = dbc[..., dt_rank:dt_rank + d_state]
        Cm = dbc[..., dt_rank + d_state:]
        delta = _softplus(jnp.dot(dt.astype(jnp.bfloat16), p["w_dtp"],
                                  preferred_element_type=jnp.float32)
                          + p["b_dtp"][0])
        A_neg = -jnp.exp(p["A_logT"])                          # (N, Di)
        dx = delta * xc

        def step(h, inp):
            d_t, dx_t, b_t, c_t = inp
            dA = jnp.exp(d_t[None, :] * A_neg)
            h = dA * h + b_t[:, None] * dx_t[None, :]
            return h, jnp.sum(h * c_t[:, None], axis=0)

        ys = []
        for b in range(B):
            h0 = jnp.zeros((d_state, d_inner), jnp.float32)
            _, yb = jax.lax.scan(step, h0, (delta[b], dx[b], Bm[b], Cm[b]))
            ys.append(yb)
        y = (jnp.stack(ys, axis=0) + xc * p["D_p"][0]) * _silu(z)
        x = x + jnp.dot(y.astype(jnp.bfloat16), p["w_out"],
                        preferred_element_type=jnp.float32)
    var = jnp.mean(x * x, axis=-1, keepdims=True)
    xn = (x * jax.lax.rsqrt(var + EPS) * params["norm_f"][0]).astype(jnp.bfloat16)
    return (jnp.dot(xn, params["w_head"], preferred_element_type=jnp.float32)
            + params["b_head"][0])


if __name__ == "__main__":
    B, L = 2, 64
    D_MODEL, N_LAYERS = 128, 2            # lane-dense dims (multiples of 128)
    NAR_VOCAB, OUT_CLS = 96, 128
    cfg = make_cfg(D_MODEL, tl=32)        # 2 L tiles -> exercises the state carry

    key = jax.random.PRNGKey(0)
    k_ids, k_par = jax.random.split(key)
    ids = jax.random.randint(k_ids, (B, L), 0, NAR_VOCAB, dtype=jnp.int32)
    params = init_nar_mamba_params(k_par, vocab_size=NAR_VOCAB, d_model=D_MODEL,
                                   n_layers=N_LAYERS, out_cls_dim=OUT_CLS,
                                   d_state=cfg["d_state"], d_conv=cfg["d_conv"])

    out = nar_mamba_forward(ids, params, cfg)
    out = jax.block_until_ready(out)
    assert out.shape == (B, L, OUT_CLS), out.shape
    assert bool(jnp.all(jnp.isfinite(out)))

    # cross-check against a pure-JAX reference of the same forward pass
    ref = jax.jit(lambda i, p: ref_forward(i, p, cfg))(ids, params)
    ref = jax.block_until_ready(ref)
    err = float(jnp.max(jnp.abs(out - ref)))
    scale = float(jnp.max(jnp.abs(ref))) + 1e-6
    assert err <= 2e-2 * scale + 1e-4, f"kernel/ref mismatch: err={err} scale={scale}"

    print("KERNEL_OK")
</pallas_src>

<mosaic_0001>
module attributes {stable_mosaic.version = 11 : i64} {
  func.func @_gather_row_kernel(%arg0: i32, %arg1: memref<128xi32, #tpu.memory_space<smem>>, %arg2: memref<1x1x128xf32, #tpu.memory_space<vmem>>, %arg3: memref<1x1x128xf32, #tpu.memory_space<vmem>>) attributes {dimension_semantics = [#tpu.dimension_semantics<arbitrary>], iteration_bounds = array<i64: 128>, scalar_prefetch = 1 : i64, scratch_operands = 0 : i64, tpu.core_type = #tpu.core_type<tc>, window_params = [{transform_indices = @transform_0, window_bounds = array<i64: 1, 1, 128>}, {transform_indices = @transform_1, window_bounds = array<i64: 1, 1, 128>}]} {
    %c0 = arith.constant 0 : index
    %c0_0 = arith.constant 0 : index
    %c0_1 = arith.constant 0 : index
    %0 = vector.load %arg2[%c0, %c0_0, %c0_1] : memref<1x1x128xf32, #tpu.memory_space<vmem>>, vector<1x1x128xf32>
    %c0_2 = arith.constant 0 : index
    %c0_3 = arith.constant 0 : index
    %c0_4 = arith.constant 0 : index
    %1 = vector.load %arg3[%c0_2, %c0_3, %c0_4] : memref<1x1x128xf32, #tpu.memory_space<vmem>>, vector<1x1x128xf32>
    tpu.vector_store %arg3[%c0_2, %c0_3, %c0_4], %0 {strides = array<i32>} : memref<1x1x128xf32, #tpu.memory_space<vmem>>, vector<1x1x128xf32>,
    return
  }
  func.func @transform_0(%arg0: i32, %arg1: memref<128xi32, #tpu.memory_space<smem>>) -> (i32, i32, i32) {
    %0 = arith.index_cast %arg0 : i32 to index
    %1 = memref.load %arg1[%0] : memref<128xi32, #tpu.memory_space<smem>>
    %c0_i32 = arith.constant 0 : i32
    %c0_i32_0 = arith.constant 0 : i32
    %c0_i32_1 = arith.constant 0 : i32
    return %1, %c0_i32, %c0_i32_0 : i32, i32, i32
  }
  func.func @transform_1(%arg0: i32, %arg1: memref<128xi32, #tpu.memory_space<smem>>) -> (i32, i32, i32) {
    %c0_i32 = arith.constant 0 : i32
    %c0_i32_0 = arith.constant 0 : i32
    %c0_i32_1 = arith.constant 0 : i32
    return %arg0, %c0_i32, %c0_i32_0 : i32, i32, i32
  }
}

</mosaic_0001>

<llo_original>
// kernel: tpu_custom_call.1
$region0: #{tpu_custom_call.1}
  #allocation0 [shape = 'u32[]', space=smem, size = 0x4, offset = 0x4, fixed_abs, tag = 'smem constant byte address 0x4 - core index']
  #allocation1 [shape = 'u32[144,128]{1,0:T(1,128)}', space=vmem, size = 0x12000, scoped, tag = 'internal scratch']
  #allocation2 [shape = 's32[1]{0}', space=sflag, size = 0x4, scoped, tag = 'scoped memory for tpu_custom_call.1']
  #allocation3 [shape = 'u8[512]{0}', space=smem, size = 0x200, scoped, tag = 'prefetched SMEM operand 0']
  %s0 = inlined_call_operand.hbm [shape: s32[128], index: 0, kind: input, shape index: {}]
  %s1 = inlined_call_operand.hbm [shape: f32[96,1,128], index: 1, kind: input, shape index: {}]
  %s2 = inlined_call_operand.hbm [shape: f32[128,1,128], index: 2, kind: output, shape index: {}]
  %s3 = sld [smem:[#allocation0]]
  $region41: #{tpu_custom_call.1} parent=0
    _
  %s5 = ssub.s32 1, %s3
  %s6 = scalar_select 0, %s5, %s3
  %8 = dma.hbm_to_smem %s0, 16, [#allocation3], [#allocation2]
  %9 = dma.done [#allocation2], 16
  %10 = sfence
  $region1: #{tpu_custom_call.1} parent=0
    #allocation4 [shape = 'u8[1024]{0}', space=vmem, size = 0x400, scoped, tag = 'input window, operand 1']
    #allocation5 [shape = 's32[2]{0}', space=sflag, size = 0x8, scoped, tag = 'scoped memory for tpu_custom_call.1']
    #allocation6 [shape = 's32[2]{0}', space=sflag, size = 0x8, scoped, tag = 'scoped memory for tpu_custom_call.1']
    #allocation7 [shape = 'u8[1024]{0}', space=vmem, size = 0x400, scoped, tag = 'output window, operand 0']
    %11 = vsyncpa [#allocation5], 0
    %s12 = scalar_lea.sflag [#allocation5], 1
    %13 = vsyncpa %s12, 0
    %14 = vsyncpa [#allocation6], 0
    %s15 = scalar_lea.sflag [#allocation6], 1
    %16 = vsyncpa %s15, 0
    loop: start=0, step=1, limit=130
    $region2: #{tpu_custom_call.1} parent=1 // loop_pre_header
      _
    $region3: #{tpu_custom_call.1} parent=1 // loop_header
      %s18 = sphi 0, %s22
      %p19 = scmp.ge.s32.totalorder %s18, 130
      %s30 = sphi 0, %s32
      %s33 = sphi 0, %s30
      %s34 = sphi 0, %s33
      %s50 = sphi 0, %s34
      %s56 = sphi 0, %s58
      %s59 = sphi 0, %s56
      %s60 = sphi 0, %s59
      %s76 = sphi 0, %s60
    $region4: #{tpu_custom_call.1} parent=1 // loop_header_branch
      %21 = sbr.rel (%p19) target = $region8
    $region5: #{tpu_custom_call.1} parent=1 // loop_body
      %s23 = ssub.s32 %s18, 1
      %s24 = ssub.s32 %s18, 2
      %s25 = sadd.s32 %s18, 1
      %s26 = sld [smem:[#allocation3 + %s18]]
      %s27 = sld [smem:[#allocation3 + %s25]]
      %s28 = ssub.s32 %s26, %s27
      %p29 = scmp.eq.s32.totalorder %s28, 0
      %s31 = sadd.s32 %s30, 1
      %s32 = scalar_select %p29, %s30, %s31
      %p35 = pneg %p29
      %p36 = scmp.eq.s32.totalorder %s18, 127
      %p37 = por %p35, %p36
      %p38 = scmp.ne.s32.totalorder %s30, %s33
      %p39 = scmp.eq.s32.totalorder %s18, 0
      %p40 = por %p38, %p39
      %p41 = scmp.ne.s32.totalorder %s30, %s33
      %p42 = scmp.eq.s32.totalorder %s23, 127
      %p43 = por %p41, %p42
      %p44 = scmp.ne.s32.totalorder %s33, %s34
      %p45 = scmp.eq.s32.totalorder %s23, 0
      %p46 = por %p44, %p45
      %p47 = scmp.ne.s32.totalorder %s33, %s34
      %p48 = scmp.eq.s32.totalorder %s24, 127
      %p49 = por %p47, %p48
      %p51 = scmp.ne.s32.totalorder %s34, %s50
      %p52 = scmp.eq.s32.totalorder %s24, 0
      %p53 = por %p51, %p52
      %s54 = ssub.s32 %s18, %s25
      %p55 = scmp.eq.s32.totalorder %s54, 0
      %s57 = sadd.s32 %s56, 1
      %s58 = scalar_select %p55, %s56, %s57
      %p61 = pneg %p55
      %p62 = scmp.eq.s32.totalorder %s18, 127
      %p63 = por %p61, %p62
      %p64 = scmp.ne.s32.totalorder %s56, %s59
      %p65 = scmp.eq.s32.totalorder %s18, 0
      %p66 = por %p64, %p65
      %p67 = scmp.ne.s32.totalorder %s56, %s59
      %p68 = scmp.eq.s32.totalorder %s23, 127
      %p69 = por %p67, %p68
      %p70 = scmp.ne.s32.totalorder %s59, %s60
      %p71 = scmp.eq.s32.totalorder %s23, 0
      %p72 = por %p70, %p71
      %p73 = scmp.ne.s32.totalorder %s59, %s60
      %p74 = scmp.eq.s32.totalorder %s24, 127
      %p75 = por %p73, %p74
      %p77 = scmp.ne.s32.totalorder %s60, %s76
      %p78 = scmp.eq.s32.totalorder %s24, 0
      %p79 = por %p77, %p78
      %p80 = scmp.le.s32.totalorder 1, %s18
      %p81 = scmp.lt.s32.totalorder %s18, 129
      %p82 = pnand %p80, %p81
      %p83 = pneg %p82
      // Predicated region
      $region9: #{tpu_custom_call.1} parent=5 // pred_check
        _
      $region10: #{tpu_custom_call.1} parent=5 // pred_check_branch
        %85 = sbr.rel (%p82) target = $region12
      $region11: #{tpu_custom_call.1} parent=5 // pred_region
        %s86 = ssub.s32 %s18, 1
      $region12: #{tpu_custom_call.1} parent=5 // pred_fallthru
        _
      %p87 = scmp.lt.s32.totalorder %s18, 128
      // Predicated region
      $region13: #{tpu_custom_call.1} parent=5 // pred_check
        %p88 = pneg %p87
      $region14: #{tpu_custom_call.1} parent=5 // pred_check_branch
        %90 = sbr.rel (%p88) target = $region16
      $region15: #{tpu_custom_call.1} parent=5 // pred_region
        // Predicated region
        $region17: #{tpu_custom_call.1} parent=15 // pred_check
          %p91 = pneg %p40
        $region18: #{tpu_custom_call.1} parent=15 // pred_check_branch
          %93 = sbr.rel (%p91) target = $region20
        $region19: #{tpu_custom_call.1} parent=15 // pred_region
          %s94 = sand.u32 %s30, 1
          %s95 = scalar_lea.sflag [#allocation5], %s94
          %s96 = sand.u32 %s30, 1
          %s97 = scalar_lea.vmem [#allocation4], %s96
          %s98 = sld [smem:[#allocation3 + %s18]]
          %s100 = ssub.s32 16, 16
          %101 = vsyncadd %s95, %s100
          %s102 = smul.addr %s98, 16
          %s103 = scalar_lea.hbm %s1, %s102
          %s105 = sshll.u32 %s97, 4
          %s106 = int_to_ptr.vmem [resolvable:$true] %s105
          %108 = dma.hbm_to_vmem [thread:$0]  %s103, 16, %s106, %s95
        $region20: #{tpu_custom_call.1} parent=15 // pred_fallthru
          _
      $region16: #{tpu_custom_call.1} parent=5 // pred_fallthru
        _
      %p109 = scmp.le.s32.totalorder 1, %s18
      %p110 = scmp.lt.s32.totalorder %s18, 129
      %p111 = pnand %p109, %p110
      %p112 = pneg %p111
      // Predicated region
      $region21: #{tpu_custom_call.1} parent=5 // pred_check
        _
      $region22: #{tpu_custom_call.1} parent=5 // pred_check_branch
        %114 = sbr.rel (%p111) target = $region24
      $region23: #{tpu_custom_call.1} parent=5 // pred_region
        %s115 = ssub.s32 %s18, 1
        %s116 = sand.u32 %s33, 1
        %s117 = scalar_lea.sflag [#allocation5], %s116
        %s118 = sand.u32 %s33, 1
        %s119 = scalar_lea.vmem [#allocation4], %s118
        // Predicated region
        $region25: #{tpu_custom_call.1} parent=23 // pred_check
          %p120 = pneg %p46
        $region26: #{tpu_custom_call.1} parent=23 // pred_check_branch
          %122 = sbr.rel (%p120) target = $region28
        $region27: #{tpu_custom_call.1} parent=23 // pred_region
          %123 = dma.done %s117, 16
        $region28: #{tpu_custom_call.1} parent=23 // pred_fallthru
          _
        %s124 = sand.u32 %s33, 1
        %s125 = scalar_lea.sflag [#allocation5], %s124
        %s126 = sand.u32 %s33, 1
        %s127 = scalar_lea.vmem [#allocation4], %s126
        %p128 = pneg %p46
        %p129 = pneg %p43
        %p130 = pneg %p72
        %p131 = pneg %p69
        %s132 = sand.u32 %s59, 1
        %s133 = scalar_lea.sflag [#allocation6], %s132
        %s134 = sand.u32 %s59, 1
        %s135 = scalar_lea.vmem [#allocation7], %s134
        %s136 = sld [smem:[#allocation3 + %s23]]
        %v137 = vld [vmem:[%s119] sm:$0x1]
        %138 = vst [vmem:[%s135] sm:$0x1] %v137
        %s139 = sand.u32 %s59, 1
        %s140 = scalar_lea.sflag [#allocation6], %s139
        %s141 = sand.u32 %s59, 1
        %s142 = scalar_lea.vmem [#allocation7], %s141
        // Predicated region
        $region29: #{tpu_custom_call.1} parent=23 // pred_check
          %p143 = pneg %p69
        $region30: #{tpu_custom_call.1} parent=23 // pred_check_branch
          %145 = sbr.rel (%p143) target = $region32
        $region31: #{tpu_custom_call.1} parent=23 // pred_region
          %s147 = ssub.s32 16, 16
          %148 = vsyncadd %s140, %s147
          %s149 = smul.addr %s23, 16
          %s150 = scalar_lea.hbm %s2, %s149
          %s152 = sshll.u32 %s142, 4
          %s153 = int_to_ptr.vmem [resolvable:$true] %s152
          %155 = dma.vmem_to_hbm [thread:$0]  %s153, 16, %s150, %s140
        $region32: #{tpu_custom_call.1} parent=23 // pred_fallthru
          _
      $region24: #{tpu_custom_call.1} parent=5 // pred_fallthru
        _
      %p156 = scmp.le.s32.totalorder 2, %s18
      // Predicated region
      $region33: #{tpu_custom_call.1} parent=5 // pred_check
        %p157 = pneg %p156
      $region34: #{tpu_custom_call.1} parent=5 // pred_check_branch
        %159 = sbr.rel (%p157) target = $region36
      $region35: #{tpu_custom_call.1} parent=5 // pred_region
        %s160 = ssub.s32 %s18, 2
        // Predicated region
        $region37: #{tpu_custom_call.1} parent=35 // pred_check
          %p161 = pneg %p75
        $region38: #{tpu_custom_call.1} parent=35 // pred_check_branch
          %163 = sbr.rel (%p161) target = $region40
        $region39: #{tpu_custom_call.1} parent=35 // pred_region
          %s164 = sand.u32 %s60, 1
          %s165 = scalar_lea.sflag [#allocation6], %s164
          %s166 = sand.u32 %s60, 1
          %s167 = scalar_lea.vmem [#allocation7], %s166
          %168 = dma.done %s165, 16
        $region40: #{tpu_custom_call.1} parent=35 // pred_fallthru
          _
      $region36: #{tpu_custom_call.1} parent=5 // pred_fallthru
        _
    $region6: #{tpu_custom_call.1} parent=1 // loop_footer
      %s22 = sadd.s32 1, %s18
    $region7: #{tpu_custom_call.1} parent=1 // loop_footer_branch
      %17 = sbr.rel target = $region3
    $region8: #{tpu_custom_call.1} parent=1 // loop_exit
      _
    %169 = vsyncpa [#allocation5], 1
    %s170 = scalar_lea.sflag [#allocation5], 1
    %171 = vsyncpa %s170, 1
    %172 = vsyncpa [#allocation6], 1
    %s173 = scalar_lea.sflag [#allocation6], 1
    %174 = vsyncpa %s173, 1

</llo_original>
